<compile_context>
chip_gen: v7x
topology: tpu7x:2x2x1
jax: 0.10.0
libtpu: 0.0.40
codegen_flags: <defaults>
</compile_context>

<pallas_src>
import math
from functools import partial

import jax
import jax.numpy as jnp
from jax.experimental import pallas as pl
from jax.experimental.pallas import tpu as pltpu


def _round_up(x, m):
    return ((x + m - 1) // m) * m


def _vmem_capacity():
    try:
        return int(pltpu.get_tpu_info().vmem_capacity_bytes)
    except Exception:
        return 64 << 20        # conservative (v7x per-TC VMEM)


# ----------------------------------------------------------------------------
# Pallas kernel 1: row-tiled fused linear  (x @ W^T + b)
# ----------------------------------------------------------------------------
def _linear_kernel(x_ref, w_ref, b_ref, o_ref, *, mxu_dtype):
    x = x_ref[...].astype(mxu_dtype)          # (TM, K)
    w = w_ref[...].astype(mxu_dtype)          # (K, Nout) -- same block every step (stays resident)
    acc = jnp.dot(x, w, preferred_element_type=jnp.float32)
    o_ref[...] = (acc + b_ref[...].astype(jnp.float32)).astype(o_ref.dtype)


def pallas_linear(x, w_t, b, out_dtype=None, *, tm=1024, mxu_dtype=jnp.bfloat16):
    """x:(R,K) @ w_t:(K,Nout) + b, row-tiled / double-buffered.  Rows are padded
    only up to the effective tile (<= tm-1 wasted rows)."""
    R, K = x.shape
    Nout = w_t.shape[1]
    out_dtype = out_dtype if out_dtype is not None else x.dtype
    if R >= 128:
        tm_eff = min(tm, _round_up(R, 128))
    else:
        tm_eff = _round_up(R, 8)
    Rp = _round_up(R, tm_eff)
    if Rp != R:
        x = jnp.pad(x, ((0, Rp - R), (0, 0)))
    out = pl.pallas_call(
        partial(_linear_kernel, mxu_dtype=mxu_dtype),
        out_shape=jax.ShapeDtypeStruct((Rp, Nout), out_dtype),
        grid=(Rp // tm_eff,),
        in_specs=[
            pl.BlockSpec((tm_eff, K), lambda i: (i, 0)),
            pl.BlockSpec((K, Nout), lambda i: (0, 0)),
            pl.BlockSpec((1, Nout), lambda i: (0, 0)),
        ],
        out_specs=pl.BlockSpec((tm_eff, Nout), lambda i: (i, 0)),
        compiler_params=pltpu.CompilerParams(
            dimension_semantics=("parallel",)),
    )(x, w_t, b.reshape(1, Nout))
    return out[:R]


# ----------------------------------------------------------------------------
# Pallas kernel 2: MS deformable attention core
#   grid step = one (batch, head, query-tile); per level the H*W axis is
#   processed in `chunk`-row pieces: build a (chunk, Tq) one-hot
#   bilinear*attention matrix and MXU-multiply the (D, chunk) value slice
#   against it (lane dim = Tq -> lane-dense).
# ----------------------------------------------------------------------------
def _msda_core_kernel(*refs, spatial_shapes, n_points, chunk):
    L = len(spatial_shapes)
    v_refs = refs[:L]                               # each (1, 1, D, H_l*W_l), value dtype
    pack_ref, out_ref = refs[L], refs[L + 1]        # (1,1,3*L*P,Tq) f32, (1,1,D,Tq) f32
    P = n_points
    LP = L * P
    D, Tq = out_ref.shape[2], out_ref.shape[3]

    pack = pack_ref[0, 0].astype(jnp.float32)       # (3*LP, Tq)
    lx_all = pack[:LP]
    ly_all = pack[LP:2 * LP]
    logits = pack[2 * LP:]

    # softmax over levels*points; reciprocal goes to the EUP slot (free next to
    # the VALU-bound scatter).  ~1e-3 relative error on the weights (documented).
    m = jnp.max(logits, axis=0, keepdims=True)
    e = jnp.exp(logits - m)
    attn = e * pl.reciprocal(jnp.sum(e, axis=0, keepdims=True), approx=True)

    # chunk-local row index, hoisted once (JAX does not CSE broadcasts)
    max_hw = max(h * w for h, w in spatial_shapes)
    rows = min(chunk, max_hw)
    row_full = jax.lax.broadcasted_iota(jnp.int32, (rows, Tq), 0)

    acc = jnp.zeros((D, Tq), jnp.float32)
    for l, (H, W) in enumerate(spatial_shapes):
        HW = H * W
        # per-point prep for this level, all f32 VPU math (v5e has no bf16 VPU)
        x = lx_all[l * P:(l + 1) * P] * W - 0.5          # (P, Tq)
        y = ly_all[l * P:(l + 1) * P] * H - 0.5
        a = attn[l * P:(l + 1) * P]
        x0f = jnp.floor(x)
        y0f = jnp.floor(y)
        fx = x - x0f
        fy = y - y0f
        x0 = x0f.astype(jnp.int32)
        y0 = y0f.astype(jnp.int32)

        # align_corners=False / zero padding, same as the CUDA kernel.
        # validity stays INSIDE contrib: out-of-range corners contribute 0 and
        # never alias a neighbouring cell even though idx may wrap rows.
        corners = []
        for dx, dy, w in ((0, 0, (1.0 - fx) * (1.0 - fy)),
                          (1, 0, fx * (1.0 - fy)),
                          (0, 1, (1.0 - fx) * fy),
                          (1, 1, fx * fy)):
            xi = x0 + dx
            yi = y0 + dy
            valid = ((xi >= 0) & (xi < W) & (yi >= 0) & (yi < H)).astype(jnp.float32)
            corners.append((yi * W + xi, a * w * valid))   # (P,Tq) idx, (P,Tq) contrib

        for c0 in range(0, HW, chunk):
            ch = min(chunk, HW - c0)
            row = row_full if ch == rows else row_full[:ch]
            agg = jnp.zeros((ch, Tq), jnp.float32)
            for idx, contrib in corners:
                idx_c = idx - c0                            # chunk-local corner index
                for p in range(P):
                    hit = (row == idx_c[p:p + 1]).astype(jnp.float32)
                    agg = agg + hit * contrib[p:p + 1]
            # (D, ch) value slice straight from the resident block; c0 is a
            # static multiple of 128 -> aligned lane load.
            v_chunk = v_refs[l][0, 0, :, pl.ds(c0, ch)]
            acc = acc + jnp.dot(v_chunk, agg.astype(v_chunk.dtype),
                                preferred_element_type=jnp.float32)

    out_ref[0, 0] = acc.astype(out_ref.dtype)               # lane-dense store (lanes = Tq)


def msda_core(v_levels, loc_pack, spatial_shapes, *, tq=None, chunk=512):
    """v_levels: list of (N, M, D, H_l*W_l)   loc_pack: (N, M, 3*L*P, Lq)
    returns (N, M, D, Lq) f32."""
    spatial_shapes = tuple((int(h), int(w)) for h, w in spatial_shapes)
    L = len(spatial_shapes)
    N, M, D, _ = v_levels[0].shape
    LP3, Lq = loc_pack.shape[2], loc_pack.shape[3]
    P = (LP3 // 3) // L
    chunk = max(128, (int(chunk) // 128) * 128)              # aligned slice starts

    # query tile: multiple of 128 chosen to minimise padding of Lq
    if Lq < 128:
        tq_eff = _round_up(Lq, 8)
    else:
        cands = (int(tq),) if tq else (128, 256)
        tq_eff = min(cands, key=lambda t: (_round_up(Lq, t), -t))
    Lqp = _round_up(Lq, tq_eff)
    if Lqp != Lq:
        loc_pack = jnp.pad(loc_pack, ((0, 0), (0, 0), (0, 0), (0, Lqp - Lq)))

    kernel = partial(_msda_core_kernel, spatial_shapes=spatial_shapes,
                     n_points=P, chunk=chunk)

    v_specs = [pl.BlockSpec((1, 1, D, h * w), lambda b, hh, qi: (b, hh, 0, 0))
               for (h, w) in spatial_shapes]
    pack_spec = pl.BlockSpec((1, 1, LP3, tq_eff), lambda b, hh, qi: (b, hh, 0, qi))

    # generation-aware VMEM budget: double-buffered blocks + chunked working set
    elt_v = v_levels[0].dtype.itemsize
    v_blk = sum(elt_v * D * h * w for h, w in spatial_shapes)
    pack_blk = 4 * LP3 * tq_eff
    out_blk = 4 * D * tq_eff
    rows = min(chunk, max(h * w for h, w in spatial_shapes))
    live = 4 * rows * tq_eff * 8 + 4 * LP3 * tq_eff * 8      # agg/iota/mask + per-point temporaries
    needed = 2 * (v_blk + pack_blk + out_blk) + 3 * live + (8 << 20)
    cap = _vmem_capacity()
    vmem_limit = int(min(max(needed, 32 << 20), cap - (2 << 20)))

    out = pl.pallas_call(
        kernel,
        out_shape=jax.ShapeDtypeStruct((N, M, D, Lqp), jnp.float32),
        grid=(N, M, Lqp // tq_eff),
        in_specs=v_specs + [pack_spec],
        out_specs=pl.BlockSpec((1, 1, D, tq_eff), lambda b, hh, qi: (b, hh, 0, qi)),
        compiler_params=pltpu.CompilerParams(
            dimension_semantics=("parallel", "parallel", "parallel"),
            vmem_limit_bytes=vmem_limit),
    )(*v_levels, loc_pack)
    return out[:, :, :, :Lq]


# ----------------------------------------------------------------------------
# Parameter init (replicates MSDeformAttn._reset_parameters, deterministic)
# ----------------------------------------------------------------------------
def init_params(key, d_model, n_levels, n_heads, n_points):
    C, M, L, P = d_model, n_heads, n_levels, n_points
    k1, k2 = jax.random.split(key)

    def xavier(k, out_f, in_f):
        bound = math.sqrt(6.0 / (in_f + out_f))
        return jax.random.uniform(k, (out_f, in_f), jnp.float32, -bound, bound)

    thetas = jnp.arange(M, dtype=jnp.float32) * (2.0 * math.pi / M)
    grid_init = jnp.stack([jnp.cos(thetas), jnp.sin(thetas)], -1)            # (M, 2)
    grid_init = grid_init / jnp.max(jnp.abs(grid_init), axis=-1, keepdims=True)
    grid_init = jnp.tile(grid_init[:, None, None, :], (1, L, P, 1))          # (M, L, P, 2)
    grid_init = grid_init * jnp.arange(1, P + 1, dtype=jnp.float32)[None, None, :, None]
    so_bias = grid_init.reshape(-1)

    return dict(
        sampling_offsets_w_t=jnp.zeros((C, M * L * P * 2), jnp.float32),
        sampling_offsets_b=so_bias,
        attention_weights_w_t=jnp.zeros((C, M * L * P), jnp.float32),
        attention_weights_b=jnp.zeros((M * L * P,), jnp.float32),
        value_proj_w_t=xavier(k1, C, C).T,
        value_proj_b=jnp.zeros((C,), jnp.float32),
        output_proj_w_t=xavier(k2, C, C).T,
        output_proj_b=jnp.zeros((C,), jnp.float32),
    )


# ----------------------------------------------------------------------------
# Forward pass (glue in JAX, hot paths in Pallas).  `lin_fn` / `core_fn`
# pluggable so the same glue drives the Pallas path and the jnp reference.
# ----------------------------------------------------------------------------
def msdeform_attn_forward(params, query, reference_points, input_flatten,
                          spatial_shapes, level_start_index,
                          input_padding_mask=None, *,
                          d_model, n_levels, n_heads, n_points,
                          lin_fn=pallas_linear, core_fn=msda_core,
                          value_dtype=jnp.bfloat16):
    N, Lq, C = query.shape
    _, Len_in, _ = input_flatten.shape
    M, L, P = n_heads, n_levels, n_points
    D = d_model // n_heads
    spatial_shapes = tuple((int(h), int(w)) for h, w in spatial_shapes)
    level_start = tuple(int(s) for s in level_start_index)
    assert sum(h * w for h, w in spatial_shapes) == Len_in

    # value projection, emitted directly in the MXU/value dtype (bf16 halves the
    # value slab's HBM + double-buffered VMEM footprint on every generation)
    value = lin_fn(input_flatten.reshape(N * Len_in, C),
                   params["value_proj_w_t"], params["value_proj_b"],
                   out_dtype=value_dtype).reshape(N, Len_in, C)
    if input_padding_mask is not None:
        value = jnp.where(input_padding_mask[..., None],
                          jnp.zeros((), value.dtype), value)

    # per-level head-major slabs (N, M, D, H_l*W_l); one fused
    # slice+reshape+transpose per level (no full (N,M,D,S) intermediate).
    # TODO(synk): emitting the value projection directly in this layout would
    # remove this last HBM copy of the value tensor.
    v_levels = [value[:, s:s + h * w, :].reshape(N, h * w, M, D).transpose(0, 2, 3, 1)
                for (h, w), s in zip(spatial_shapes, level_start)]

    # fused sampling-offsets + attention-logits projection (same activation operand)
    q2 = query.reshape(N * Lq, C)
    w_fused = jnp.concatenate([params["sampling_offsets_w_t"],
                               params["attention_weights_w_t"]], axis=1)
    b_fused = jnp.concatenate([params["sampling_offsets_b"],
                               params["attention_weights_b"]], axis=0)
    fused = lin_fn(q2, w_fused, b_fused, out_dtype=jnp.float32)
    n_off = M * L * P * 2
    offsets = fused[:, :n_off].reshape(N, Lq, M, L, P, 2)
    logits = fused[:, n_off:].reshape(N, Lq, M, L * P)      # softmax happens IN the core kernel

    # sampling locations (elementwise glue)
    ss = jnp.asarray(spatial_shapes, jnp.float32)           # (L, 2) rows = (H, W)
    if reference_points.shape[-1] == 2:
        offset_normalizer = jnp.stack([ss[:, 1], ss[:, 0]], -1)       # (W, H)
        sampling_locations = (reference_points[:, :, None, :, None, :]
                              + offsets / offset_normalizer[None, None, None, :, None, :])
    elif reference_points.shape[-1] == 4:
        sampling_locations = (reference_points[:, :, None, :, None, :2]
                              + offsets / P
                              * reference_points[:, :, None, :, None, 2:] * 0.5)
    else:
        raise ValueError("last dim of reference_points must be 2 or 4")

    # pack (locx | locy | logits) head-major, query-minor: ONE DMA per grid step
    loc = sampling_locations.transpose(0, 2, 3, 4, 5, 1)    # (N, M, L, P, 2, Lq)
    locx = loc[:, :, :, :, 0, :].reshape(N, M, L * P, Lq)
    locy = loc[:, :, :, :, 1, :].reshape(N, M, L * P, Lq)
    logits_mt = logits.transpose(0, 2, 3, 1)                # (N, M, L*P, Lq)
    loc_pack = jnp.concatenate([locx, locy, logits_mt], axis=2).astype(jnp.float32)

    core = core_fn(v_levels, loc_pack, spatial_shapes)      # (N, M, D, Lq) f32
    core = core.transpose(0, 3, 1, 2).reshape(N, Lq, C)
    # TODO(synk): fuse the output projection into the core kernel (head axis as a
    # reduction) to drop this transpose + one HBM round-trip.

    out = lin_fn(core.reshape(N * Lq, C),
                 params["output_proj_w_t"], params["output_proj_b"],
                 out_dtype=query.dtype)
    return out.reshape(N, Lq, C)


# ----------------------------------------------------------------------------
# Pure-jnp reference (correctness check for the Pallas path)
# ----------------------------------------------------------------------------
def _linear_ref(x, w_t, b, out_dtype=None):
    y = x.astype(jnp.float32) @ w_t.astype(jnp.float32) + b
    return y.astype(out_dtype) if out_dtype is not None else y


def _msda_core_ref(v_levels, loc_pack, spatial_shapes):
    N, M, LP3, Lq = loc_pack.shape
    LP = LP3 // 3
    L = len(spatial_shapes)
    P = LP // L
    D = v_levels[0].shape[2]
    locx = loc_pack[:, :, :LP, :]
    locy = loc_pack[:, :, LP:2 * LP, :]
    logits = loc_pack[:, :, 2 * LP:, :]
    attn = jax.nn.softmax(logits, axis=2)                   # over L*P
    out = jnp.zeros((N, M, D, Lq), jnp.float32)
    B = N * M
    for l, (H, W) in enumerate(spatial_shapes):
        vf = v_levels[l].astype(jnp.float32).reshape(B, D, H * W)
        x = locx[:, :, l * P:(l + 1) * P, :] * W - 0.5       # (N,M,P,Lq)
        y = locy[:, :, l * P:(l + 1) * P, :] * H - 0.5
        a = attn[:, :, l * P:(l + 1) * P, :]
        x0 = jnp.floor(x); y0 = jnp.floor(y)
        fx = x - x0; fy = y - y0
        x0 = x0.astype(jnp.int32); y0 = y0.astype(jnp.int32)
        for dx, dy, w in ((0, 0, (1 - fx) * (1 - fy)), (1, 0, fx * (1 - fy)),
                          (0, 1, (1 - fx) * fy), (1, 1, fx * fy)):
            xi = x0 + dx; yi = y0 + dy
            valid = ((xi >= 0) & (xi < W) & (yi >= 0) & (yi < H)).astype(jnp.float32)
            idx = (jnp.clip(yi, 0, H - 1) * W + jnp.clip(xi, 0, W - 1)
                   ).reshape(B, P * Lq)
            g = jnp.take_along_axis(vf, idx[:, None, :], axis=2)      # (B, D, P*Lq)
            g = g.reshape(N, M, D, P, Lq)
            out = out + jnp.sum((a * w * valid)[:, :, None, :, :] * g, axis=3)
    return out


# ----------------------------------------------------------------------------
if __name__ == "__main__":
    d_model, n_levels, n_heads, n_points = 32, 4, 8, 4
    N, Lq = 2, 8
    spatial_shapes = [(16, 16), (8, 8), (4, 4), (2, 2)]
    level_start = [0]
    for H, W in spatial_shapes[:-1]:
        level_start.append(level_start[-1] + H * W)
    Len_in = sum(h * w for h, w in spatial_shapes)            # 340

    key = jax.random.PRNGKey(0)
    kp, kq, kr, kf = jax.random.split(key, 4)
    params = init_params(kp, d_model, n_levels, n_heads, n_points)
    query = jax.random.normal(kq, (N, Lq, d_model), jnp.float32)
    reference_points = jax.random.uniform(kr, (N, Lq, n_levels, 2), jnp.float32)
    input_flatten = jax.random.normal(kf, (N, Len_in, d_model), jnp.float32)

    common = dict(d_model=d_model, n_levels=n_levels,
                  n_heads=n_heads, n_points=n_points)

    # pure-jnp reference (all f32)
    ref = msdeform_attn_forward(params, query, reference_points, input_flatten,
                                spatial_shapes, level_start,
                                lin_fn=_linear_ref, core_fn=_msda_core_ref,
                                value_dtype=jnp.float32, **common)
    ref = jax.block_until_ready(ref)

    # Pallas path, f32 operands end-to-end (tight tolerance)
    out_f32 = msdeform_attn_forward(
        params, query, reference_points, input_flatten,
        spatial_shapes, level_start,
        lin_fn=partial(pallas_linear, mxu_dtype=jnp.float32),
        core_fn=msda_core, value_dtype=jnp.float32, **common)
    out_f32 = jax.block_until_ready(out_f32)
    assert out_f32.shape == (N, Lq, d_model)
    assert bool(jnp.all(jnp.isfinite(out_f32)))
    assert jnp.allclose(out_f32, ref, rtol=2e-2, atol=2e-2), "f32 mismatch vs jnp reference"

    # Pallas path, bf16 value/MXU operands (recommended default on v5e/v6e/v7x:
    # bf16-native MXU + halved value-slab HBM/VMEM; f32 accumulation & VPU math).
    out_bf16 = msdeform_attn_forward(
        params, query, reference_points, input_flatten,
        spatial_shapes, level_start,
        lin_fn=partial(pallas_linear, mxu_dtype=jnp.bfloat16),
        core_fn=msda_core, value_dtype=jnp.bfloat16, **common)
    out_bf16 = jax.block_until_ready(out_bf16)
    assert out_bf16.shape == (N, Lq, d_model)
    assert jnp.allclose(out_bf16, ref, rtol=8e-2, atol=8e-2), "bf16 mismatch vs jnp reference"

    print("KERNEL_OK")
</pallas_src>

<mosaic_0001>
module attributes {stable_mosaic.version = 11 : i64} {
  func.func @_linear_kernel(%arg0: i32, %arg1: memref<768x32xf32, #tpu.memory_space<vmem>>, %arg2: memref<32x32xf32, #tpu.memory_space<vmem>>, %arg3: memref<1x32xf32, #tpu.memory_space<vmem>>, %arg4: memref<768x32xf32, #tpu.memory_space<vmem>>) attributes {dimension_semantics = [#tpu.dimension_semantics<parallel>], iteration_bounds = array<i64: 1>, scalar_prefetch = 0 : i64, scratch_operands = 0 : i64, tpu.core_type = #tpu.core_type<tc>, window_params = [{transform_indices = @transform_0, window_bounds = array<i64: 768, 32>}, {pipeline_mode = #tpu.pipeline_mode<synchronous>, transform_indices = @transform_1, window_bounds = array<i64: 32, 32>}, {pipeline_mode = #tpu.pipeline_mode<synchronous>, transform_indices = @transform_2, window_bounds = array<i64: 1, 32>}, {transform_indices = @transform_3, window_bounds = array<i64: 768, 32>}]} {
    %c0 = arith.constant 0 : index
    %c0_0 = arith.constant 0 : index
    %0 = vector.load %arg1[%c0, %c0_0] : memref<768x32xf32, #tpu.memory_space<vmem>>, vector<768x32xf32>
    %c0_1 = arith.constant 0 : index
    %c0_2 = arith.constant 0 : index
    %1 = vector.load %arg2[%c0_1, %c0_2] : memref<32x32xf32, #tpu.memory_space<vmem>>, vector<32x32xf32>
    %cst = arith.constant dense<0.000000e+00> : vector<768x32xf32>
    %2 = tpu.matmul %0, %1, %cst {dimension_numbers = #tpu.dot_dimension_numbers<[1], [0], [0], [1], [0, 0, 1, 1], [], []>} : vector<768x32xf32>, vector<32x32xf32>, vector<768x32xf32> -> vector<768x32xf32>
    %c0_3 = arith.constant 0 : index
    %c0_4 = arith.constant 0 : index
    %3 = vector.load %arg3[%c0_3, %c0_4] : memref<1x32xf32, #tpu.memory_space<vmem>>, vector<1x32xf32>
    %4 = vector.broadcast %3 : vector<1x32xf32> to vector<768x32xf32>
    %5 = arith.addf %2, %4 : vector<768x32xf32>
    %c0_5 = arith.constant 0 : index
    %c0_6 = arith.constant 0 : index
    %6 = vector.load %arg4[%c0_5, %c0_6] : memref<768x32xf32, #tpu.memory_space<vmem>>, vector<768x32xf32>
    tpu.vector_store %arg4[%c0_5, %c0_6], %5 {strides = array<i32>} : memref<768x32xf32, #tpu.memory_space<vmem>>, vector<768x32xf32>,
    return
  }
  func.func @transform_0(%arg0: i32) -> (i32, i32) {
    %c0_i32 = arith.constant 0 : i32
    %c0_i32_0 = arith.constant 0 : i32
    return %arg0, %c0_i32 : i32, i32
  }
  func.func @transform_1(%arg0: i32) -> (i32, i32) {
    %c0_i32 = arith.constant 0 : i32
    %c0_i32_0 = arith.constant 0 : i32
    %c0_i32_1 = arith.constant 0 : i32
    return %c0_i32, %c0_i32_0 : i32, i32
  }
  func.func @transform_2(%arg0: i32) -> (i32, i32) {
    %c0_i32 = arith.constant 0 : i32
    %c0_i32_0 = arith.constant 0 : i32
    %c0_i32_1 = arith.constant 0 : i32
    return %c0_i32, %c0_i32_0 : i32, i32
  }
  func.func @transform_3(%arg0: i32) -> (i32, i32) {
    %c0_i32 = arith.constant 0 : i32
    %c0_i32_0 = arith.constant 0 : i32
    return %arg0, %c0_i32 : i32, i32
  }
}

</mosaic_0001>

<llo_original>
// kernel: tpu_custom_call.1
$region0: #{tpu_custom_call.1}
  #allocation0 [shape = 'u32[]', space=smem, size = 0x4, offset = 0x4, fixed_abs, tag = 'smem constant byte address 0x4 - core index']
  #allocation1 [shape = 'u32[144,128]{1,0:T(1,128)}', space=vmem, size = 0x12000, scoped, tag = 'internal scratch']
  %s0 = inlined_call_operand.vmem [shape: f32[768,32], index: 0, kind: input, shape index: {}]
  %s1 = inlined_call_operand.vmem [shape: f32[32,32], index: 1, kind: input, shape index: {}]
  %s2 = inlined_call_operand.vmem [shape: f32[1,32], index: 2, kind: input, shape index: {}]
  %s3 = inlined_call_operand.vmem [shape: f32[768,32], index: 3, kind: output, shape index: {}]
  %s4 = sld [smem:[#allocation0]]
  $region22: #{tpu_custom_call.1} parent=0
    _
  %s6 = ssub.s32 1, %s4
  %s7 = scalar_select 0, %s6, %s4
  // Predicated region
  $region2: #{tpu_custom_call.1} parent=0 // pred_check
    _
  $region3: #{tpu_custom_call.1} parent=0 // pred_check_branch
    %9 = sbr.rel (0) target = $region5
  $region4: #{tpu_custom_call.1} parent=0 // pred_region
    _
  $region5: #{tpu_custom_call.1} parent=0 // pred_fallthru
    _
  // Predicated region
  $region6: #{tpu_custom_call.1} parent=0 // pred_check
    _
  $region7: #{tpu_custom_call.1} parent=0 // pred_check_branch
    %11 = sbr.rel (0) target = $region9
  $region8: #{tpu_custom_call.1} parent=0 // pred_region
    _
  $region9: #{tpu_custom_call.1} parent=0 // pred_fallthru
    _
  // Predicated region
  $region10: #{tpu_custom_call.1} parent=0 // pred_check
    _
  $region11: #{tpu_custom_call.1} parent=0 // pred_check_branch
    %13 = sbr.rel (0) target = $region13
  $region12: #{tpu_custom_call.1} parent=0 // pred_region
    _
  $region13: #{tpu_custom_call.1} parent=0 // pred_fallthru
    _
  %v14 = vld [vmem:[%s0] sm:$0xff]
  %v15 = vld [vmem:[%s0 + $0x8] sm:$0xff]
  %v16 = vld [vmem:[%s0 + $0x10] sm:$0xff]
  %v17 = vld [vmem:[%s0 + $0x18] sm:$0xff]
  %v18 = vld [vmem:[%s0 + $0x20] sm:$0xff]
  %v19 = vld [vmem:[%s0 + $0x28] sm:$0xff]
  %v20 = vld [vmem:[%s0 + $0x30] sm:$0xff]
  %v21 = vld [vmem:[%s0 + $0x38] sm:$0xff]
  %v22 = vld [vmem:[%s0 + $0x40] sm:$0xff]
  %v23 = vld [vmem:[%s0 + $0x48] sm:$0xff]
  %v24 = vld [vmem:[%s0 + $0x50] sm:$0xff]
  %v25 = vld [vmem:[%s0 + $0x58] sm:$0xff]
  %v26 = vld [vmem:[%s0 + $0x60] sm:$0xff]
  %v27 = vld [vmem:[%s0 + $0x68] sm:$0xff]
  %v28 = vld [vmem:[%s0 + $0x70] sm:$0xff]
  %v29 = vld [vmem:[%s0 + $0x78] sm:$0xff]
  %v30 = vld [vmem:[%s0 + $0x80] sm:$0xff]
  %v31 = vld [vmem:[%s0 + $0x88] sm:$0xff]
  %v32 = vld [vmem:[%s0 + $0x90] sm:$0xff]
  %v33 = vld [vmem:[%s0 + $0x98] sm:$0xff]
  %v34 = vld [vmem:[%s0 + $0xa0] sm:$0xff]
  %v35 = vld [vmem:[%s0 + $0xa8] sm:$0xff]
  %v36 = vld [vmem:[%s0 + $0xb0] sm:$0xff]
  %v37 = vld [vmem:[%s0 + $0xb8] sm:$0xff]
  %v38 = vld [vmem:[%s0 + $0xc0] sm:$0xff]
  %v39 = vld [vmem:[%s0 + $0xc8] sm:$0xff]
  %v40 = vld [vmem:[%s0 + $0xd0] sm:$0xff]
  %v41 = vld [vmem:[%s0 + $0xd8] sm:$0xff]
  %v42 = vld [vmem:[%s0 + $0xe0] sm:$0xff]
  %v43 = vld [vmem:[%s0 + $0xe8] sm:$0xff]
  %v44 = vld [vmem:[%s0 + $0xf0] sm:$0xff]
  %v45 = vld [vmem:[%s0 + $0xf8] sm:$0xff]
  %v46 = vld [vmem:[%s0 + $0x100] sm:$0xff]
  %v47 = vld [vmem:[%s0 + $0x108] sm:$0xff]
  %v48 = vld [vmem:[%s0 + $0x110] sm:$0xff]
  %v49 = vld [vmem:[%s0 + $0x118] sm:$0xff]
  %v50 = vld [vmem:[%s0 + $0x120] sm:$0xff]
  %v51 = vld [vmem:[%s0 + $0x128] sm:$0xff]
  %v52 = vld [vmem:[%s0 + $0x130] sm:$0xff]
  %v53 = vld [vmem:[%s0 + $0x138] sm:$0xff]
  %v54 = vld [vmem:[%s0 + $0x140] sm:$0xff]
  %v55 = vld [vmem:[%s0 + $0x148] sm:$0xff]
  %v56 = vld [vmem:[%s0 + $0x150] sm:$0xff]
  %v57 = vld [vmem:[%s0 + $0x158] sm:$0xff]
  %v58 = vld [vmem:[%s0 + $0x160] sm:$0xff]
  %v59 = vld [vmem:[%s0 + $0x168] sm:$0xff]
  %v60 = vld [vmem:[%s0 + $0x170] sm:$0xff]
  %v61 = vld [vmem:[%s0 + $0x178] sm:$0xff]
  %v62 = vld [vmem:[%s0 + $0x180] sm:$0xff]
  %v63 = vld [vmem:[%s0 + $0x188] sm:$0xff]
  %v64 = vld [vmem:[%s0 + $0x190] sm:$0xff]
  %v65 = vld [vmem:[%s0 + $0x198] sm:$0xff]
  %v66 = vld [vmem:[%s0 + $0x1a0] sm:$0xff]
  %v67 = vld [vmem:[%s0 + $0x1a8] sm:$0xff]
  %v68 = vld [vmem:[%s0 + $0x1b0] sm:$0xff]
  %v69 = vld [vmem:[%s0 + $0x1b8] sm:$0xff]
  %v70 = vld [vmem:[%s0 + $0x1c0] sm:$0xff]
  %v71 = vld [vmem:[%s0 + $0x1c8] sm:$0xff]
  %v72 = vld [vmem:[%s0 + $0x1d0] sm:$0xff]
  %v73 = vld [vmem:[%s0 + $0x1d8] sm:$0xff]
  %v74 = vld [vmem:[%s0 + $0x1e0] sm:$0xff]
  %v75 = vld [vmem:[%s0 + $0x1e8] sm:$0xff]
  %v76 = vld [vmem:[%s0 + $0x1f0] sm:$0xff]
  %v77 = vld [vmem:[%s0 + $0x1f8] sm:$0xff]
  %v78 = vld [vmem:[%s0 + $0x200] sm:$0xff]
  %v79 = vld [vmem:[%s0 + $0x208] sm:$0xff]
  %v80 = vld [vmem:[%s0 + $0x210] sm:$0xff]
  %v81 = vld [vmem:[%s0 + $0x218] sm:$0xff]
  %v82 = vld [vmem:[%s0 + $0x220] sm:$0xff]
  %v83 = vld [vmem:[%s0 + $0x228] sm:$0xff]
  %v84 = vld [vmem:[%s0 + $0x230] sm:$0xff]
  %v85 = vld [vmem:[%s0 + $0x238] sm:$0xff]
  %v86 = vld [vmem:[%s0 + $0x240] sm:$0xff]
  %v87 = vld [vmem:[%s0 + $0x248] sm:$0xff]
  %v88 = vld [vmem:[%s0 + $0x250] sm:$0xff]
  %v89 = vld [vmem:[%s0 + $0x258] sm:$0xff]
  %v90 = vld [vmem:[%s0 + $0x260] sm:$0xff]
  %v91 = vld [vmem:[%s0 + $0x268] sm:$0xff]
  %v92 = vld [vmem:[%s0 + $0x270] sm:$0xff]
  %v93 = vld [vmem:[%s0 + $0x278] sm:$0xff]
  %v94 = vld [vmem:[%s0 + $0x280] sm:$0xff]
  %v95 = vld [vmem:[%s0 + $0x288] sm:$0xff]
  %v96 = vld [vmem:[%s0 + $0x290] sm:$0xff]
  %v97 = vld [vmem:[%s0 + $0x298] sm:$0xff]
  %v98 = vld [vmem:[%s0 + $0x2a0] sm:$0xff]
  %v99 = vld [vmem:[%s0 + $0x2a8] sm:$0xff]
  %v100 = vld [vmem:[%s0 + $0x2b0] sm:$0xff]
  %v101 = vld [vmem:[%s0 + $0x2b8] sm:$0xff]
  %v102 = vld [vmem:[%s0 + $0x2c0] sm:$0xff]
  %v103 = vld [vmem:[%s0 + $0x2c8] sm:$0xff]
  %v104 = vld [vmem:[%s0 + $0x2d0] sm:$0xff]
  %v105 = vld [vmem:[%s0 + $0x2d8] sm:$0xff]
  %v106 = vld [vmem:[%s0 + $0x2e0] sm:$0xff]
  %v107 = vld [vmem:[%s0 + $0x2e8] sm:$0xff]
  %v108 = vld [vmem:[%s0 + $0x2f0] sm:$0xff]
  %v109 = vld [vmem:[%s0 + $0x2f8] sm:$0xff]
  %v110 = vld [vmem:[%s1] sm:$0xff]
  %v111 = vld [vmem:[%s1 + $0x8] sm:$0xff]
  %v112 = vld [vmem:[%s1 + $0x10] sm:$0xff]
  %v113 = vld [vmem:[%s1 + $0x18] sm:$0xff]
  %v114 = vld [vmem:[%s2] sm:$0x1]
  %v116 = vlaneseq
  %v117 = vshrl.u32 %v116, 7
  %v118 = vsub.s32 0, %v117
  %v119 = vrot.slane %v114, %v118
  %vm121 = vcmask 261120
  %v123 = vsel %vm121, %v14, 0
  %v126 = vsel %vm121, %v15, 0
  %v129 = vsel %vm121, %v16, 0
  %v132 = vsel %vm121, %v17, 0
  %v135 = vsel %vm121, %v18, 0
  %v138 = vsel %vm121, %v19, 0
  %v141 = vsel %vm121, %v20, 0
  %v144 = vsel %vm121, %v21, 0
  %v147 = vsel %vm121, %v22, 0
  %v150 = vsel %vm121, %v23, 0
  %v153 = vsel %vm121, %v24, 0
  %v156 = vsel %vm121, %v25, 0
  %v159 = vsel %vm121, %v26, 0
  %v162 = vsel %vm121, %v27, 0
  %v165 = vsel %vm121, %v28, 0
  %v168 = vsel %vm121, %v29, 0
  %v171 = vsel %vm121, %v30, 0
  %v174 = vsel %vm121, %v31, 0
  %v177 = vsel %vm121, %v32, 0
  %v180 = vsel %vm121, %v33, 0
  %v183 = vsel %vm121, %v34, 0
  %v186 = vsel %vm121, %v35, 0
  %v189 = vsel %vm121, %v36, 0
  %v192 = vsel %vm121, %v37, 0
  %v195 = vsel %vm121, %v38, 0
  %v198 = vsel %vm121, %v39, 0
  %v201 = vsel %vm121, %v40, 0
  %v204 = vsel %vm121, %v41, 0
  %v207 = vsel %vm121, %v42, 0
  %v210 = vsel %vm121, %v43, 0
  %v213 = vsel %vm121, %v44, 0
  %v216 = vsel %vm121, %v45, 0
  %v219 = vsel %vm121, %v46, 0
  %v222 = vsel %vm121, %v47, 0
  %v225 = vsel %vm121, %v48, 0
  %v228 = vsel %vm121, %v49, 0
  %v231 = vsel %vm121, %v50, 0
  %v234 = vsel %vm121, %v51, 0
  %v237 = vsel %vm121, %v52, 0
  %v240 = vsel %vm121, %v53, 0
  %v243 = vsel %vm121, %v54, 0
  %v246 = vsel %vm121, %v55, 0
  %v249 = vsel %vm121, %v56, 0
  %v252 = vsel %vm121, %v57, 0
  %v255 = vsel %vm121, %v58, 0
  %v258 = vsel %vm121, %v59, 0
  %v261 = vsel %vm121, %v60, 0
  %v264 = vsel %vm121, %v61, 0
  %v267 = vsel %vm121, %v62, 0
  %v270 = vsel %vm121, %v63, 0
  %v273 = vsel %vm121, %v64, 0
  %v276 = vsel %vm121, %v65, 0
  %v279 = vsel %vm121, %v66, 0
  %v282 = vsel %vm121, %v67, 0
  %v285 = vsel %vm121, %v68, 0
  %v288 = vsel %vm121, %v69, 0
  %v291 = vsel %vm121, %v70, 0
  %v294 = vsel %vm121, %v71, 0
  %v297 = vsel %vm121, %v72, 0
  %v300 = vsel %vm121, %v73, 0
  %v303 = vsel %vm121, %v74, 0
  %v306 = vsel %vm121, %v75, 0
  %v309 = vsel %vm121, %v76, 0
  %v312 = vsel %vm121, %v77, 0
  %v315 = vsel %vm121, %v78, 0
  %v318 = vsel %vm121, %v79, 0
  %v321 = vsel %vm121, %v80, 0
  %v324 = vsel %vm121, %v81, 0
  %v327 = vsel %vm121, %v82, 0
  %v330 = vsel %vm121, %v83, 0
  %v333 = vsel %vm121, %v84, 0
  %v336 = vsel %vm121, %v85, 0
  %v339 = vsel %vm121, %v86, 0
  %v342 = vsel %vm121, %v87, 0
  %v345 = vsel %vm121, %v88, 0
  %v348 = vsel %vm121, %v89, 0
  %v351 = vsel %vm121, %v90, 0
  %v354 = vsel %vm121, %v91, 0
  %v357 = vsel %vm121, %v92, 0
  %v360 = vsel %vm121, %v93, 0
  %v363 = vsel %vm121, %v94, 0
  %v366 = vsel %vm121, %v95, 0
  %v369 = vsel %vm121, %v96, 0
  %v372 = vsel %vm121, %v97, 0
  %v375 = vsel %vm121, %v98, 0
  %v378 = vsel %vm121, %v99, 0
  %v381 = vsel %vm121, %v100, 0
  %v384 = vsel %vm121, %v101, 0
  %v387 = vsel %vm121, %v102, 0
  %v390 = vsel %vm121, %v103, 0
  %v393 = vsel %vm121, %v104, 0
  %v396 = vsel %vm121, %v105, 0
  %v399 = vsel %vm121, %v106, 0
  %v402 = vsel %vm121, %v107, 0
  %v405 = vsel %vm121, %v108, 0
  %v408 = vsel %vm121, %v109, 0
  %410 = vmatprep.subr.mxu0 0.0
  %411 = vmatpush1.msra.mxu0 %v110
  %412 = vmatprep.subr.mxu0 0.0
  %413 = vmatpush1.msra.mxu0 %v111
  %414 = vmatprep.subr.mxu0 0.0
  %415 = vmatpush1.msra.mxu0 %v112
  %416 = vmatprep.subr.mxu0 0.0
  %417 = vmatpush1.msra.mxu0 %v113
  %418 = vmatprep.subr.mxu0 0.0
  %419 = vmatpush1.msra.mxu0 0.0
  %420 = vmatprep.subr.mxu0 0.0
  %421 = vmatpush1.msra.mxu0 0.0
  %422 = vmatprep.subr.mxu0 0.0
  %423 = vmatpush1.msra.mxu0 0.0
  %424 = vmatprep.subr.mxu0 0.0
  %425 = vmatpush1.msra.mxu0 0.0
  %426 = vmatprep.subr.mxu0 0.0
  %427 = vmatpush1.msra.mxu0 0.0
  %428 = vmatprep.subr.mxu0 0.0
  %429 = vmatpush1.msra.mxu0 0.0
  %430 = vmatprep.subr.mxu0 0.0
  %431 = vmatpush1.msra.mxu0 0.0
  %432 = vmatprep.subr.mxu0 0.0
  %433 = vmatpush1.msra.mxu0 0.0
  %434 = vmatprep.subr.mxu0 0.0
  %435 = vmatpush1.msra.mxu0 0.0
  %436 = vmatprep.subr.mxu0 0.0
  %437 = vmatpush1.msra.mxu0 0.0
  %438 = vmatprep.subr.mxu0 0.0
  %439 = vmatpush1.msra.mxu0 0.0
  %440 = vmatprep.subr.mxu0 0.0
  %441 = vmatpush1.msra.mxu0 0.0
  %442 = vmatprep.subr.mxu0 0.0
  %443 = vmatpush1.msra.mxu0 0.0
  %444 = vmatprep.subr.mxu0 0.0
  %445 = vmatpush1.msra.mxu0 0.0
  %446 = vmatprep.subr.mxu0 0.0
  %447 = vmatpush1.msra.mxu0 0.0
  %448 = vmatprep.subr.mxu0 0.0
  %449 = vmatpush1.msra.mxu0 0.0
  %450 = vmatprep.subr.mxu0 0.0
  %451 = vmatpush1.msra.mxu0 0.0
  %452 = vmatprep.subr.mxu0 0.0
  %453 = vmatpush1.msra.mxu0 0.0
  %454 = vmatprep.subr.mxu0 0.0
  %455 = vmatpush1.msra.mxu0 0.0
  %456 = vmatprep.subr.mxu0 0.0
  %457 = vmatpush1.msra.mxu0 0.0
  %458 = vmatprep.subr.mxu0 0.0
  %459 = vmatpush1.msra.mxu0 0.0
  %460 = vmatprep.subr.mxu0 0.0
  %461 = vmatpush1.msra.mxu0 0.0
  %462 = vmatprep.subr.mxu0 0.0
  %463 = vmatpush1.msra.mxu0 0.0
  %464 = vmatprep.subr.mxu0 0.0
  %465 = vmatpush1.msra.mxu0 0.0
  %466 = vmatprep.subr.mxu0 0.0
  %467 = vmatpush1.msra.mxu0 0.0
  %468 = vmatprep.subr.mxu0 0.0
  %469 = vmatpush1.msra.mxu0 0.0
  %470 = vmatprep.subr.mxu0 0.0
  %471 = vmatpush1.msra.mxu0 0.0
  %472 = vmatprep.subr.mxu0 0.0
  %473 = vmatpush1.msra.mxu0 0.0
  %474 = vmatprep.mubr.f32.mxu0 0.0
  %475 = vmatmul.mubr.f32.gmra.mrb[0].mxu0 %v123
  %v476 = vpop.f32.mrb[0].mxu0
  %v477 = vadd.f32 %v119, %v476
  %v478 = vpop.f32.mrb[0].mxu0
  %479 = vmatprep.mubr.f32.mxu0 0.0
  %480 = vmatmul.mubr.f32.gmra.mrb[0].mxu0 %v126
  %v481 = vpop.f32.mrb[0].mxu0
  %v482 = vadd.f32 %v119, %v481
  %v483 = vpop.f32.mrb[0].mxu0
  %484 = vmatprep.mubr.f32.mxu0 0.0
  %485 = vmatmul.mubr.f32.gmra.mrb[0].mxu0 %v129
  %v486 = vpop.f32.mrb[0].mxu0
  %v487 = vadd.f32 %v119, %v486
  %v488 = vpop.f32.mrb[0].mxu0
  %489 = vmatprep.mubr.f32.mxu0 0.0
  %490 = vmatmul.mubr.f32.gmra.mrb[0].mxu0 %v132
  %v491 = vpop.f32.mrb[0].mxu0
  %v492 = vadd.f32 %v119, %v491
  %v493 = vpop.f32.mrb[0].mxu0
  %494 = vmatprep.mubr.f32.mxu0 0.0
  %495 = vmatmul.mubr.f32.gmra.mrb[0].mxu0 %v135
  %v496 = vpop.f32.mrb[0].mxu0
  %v497 = vadd.f32 %v119, %v496
  %v498 = vpop.f32.mrb[0].mxu0
  %499 = vmatprep.mubr.f32.mxu0 0.0
  %500 = vmatmul.mubr.f32.gmra.mrb[0].mxu0 %v138
  %v501 = vpop.f32.mrb[0].mxu0
  %v502 = vadd.f32 %v119, %v501
  %v503 = vpop.f32.mrb[0].mxu0
  %504 = vmatprep.mubr.f32.mxu0 0.0
  %505 = vmatmul.mubr.f32.gmra.mrb[0].mxu0 %v141
  %v506 = vpop.f32.mrb[0].mxu0
  %v507 = vadd.f32 %v119, %v506
  %v508 = vpop.f32.mrb[0].mxu0
  %509 = vmatprep.mubr.f32.mxu0 0.0
  %510 = vmatmul.mubr.f32.gmra.mrb[0].mxu0 %v144
  %v511 = vpop.f32.mrb[0].mxu0
  %v512 = vadd.f32 %v119, %v511
  %v513 = vpop.f32.mrb[0].mxu0
  %514 = vmatprep.mubr.f32.mxu0 0.0
  %515 = vmatmul.mubr.f32.gmra.mrb[0].mxu0 %v147
  %v516 = vpop.f32.mrb[0].mxu0
  %v517 = vadd.f32 %v119, %v516
  %v518 = vpop.f32.mrb[0].mxu0
  %519 = vmatprep.mubr.f32.mxu0 0.0
  %520 = vmatmul.mubr.f32.gmra.mrb[0].mxu0 %v150
  %v521 = vpop.f32.mrb[0].mxu0
  %v522 = vadd.f32 %v119, %v521
  %v523 = vpop.f32.mrb[0].mxu0
  %524 = vmatprep.mubr.f32.mxu0 0.0
  %525 = vmatmul.mubr.f32.gmra.mrb[0].mxu0 %v153
  %v526 = vpop.f32.mrb[0].mxu0
  %v527 = vadd.f32 %v119, %v526
  %v528 = vpop.f32.mrb[0].mxu0
  %529 = vmatprep.mubr.f32.mxu0 0.0
  %530 = vmatmul.mubr.f32.gmra.mrb[0].mxu0 %v156
  %v531 = vpop.f32.mrb[0].mxu0
  %v532 = vadd.f32 %v119, %v531
  %v533 = vpop.f32.mrb[0].mxu0
  %534 = vmatprep.mubr.f32.mxu0 0.0
  %535 = vmatmul.mubr.f32.gmra.mrb[0].mxu0 %v159
  %v536 = vpop.f32.mrb[0].mxu0
  %v537 = vadd.f32 %v119, %v536
  %v538 = vpop.f32.mrb[0].mxu0
  %539 = vmatprep.mubr.f32.mxu0 0.0
  %540 = vmatmul.mubr.f32.gmra.mrb[0].mxu0 %v162
  %v541 = vpop.f32.mrb[0].mxu0
  %v542 = vadd.f32 %v119, %v541
  %v543 = vpop.f32.mrb[0].mxu0
  %544 = vmatprep.mubr.f32.mxu0 0.0
  %545 = vmatmul.mubr.f32.gmra.mrb[0].mxu0 %v165
  %v546 = vpop.f32.mrb[0].mxu0
  %v547 = vadd.f32 %v119, %v546
  %v548 = vpop.f32.mrb[0].mxu0
  %549 = vmatprep.mubr.f32.mxu0 0.0
  %550 = vmatmul.mubr.f32.gmra.mrb[0].mxu0 %v168
  %v551 = vpop.f32.mrb[0].mxu0
  %v552 = vadd.f32 %v119, %v551
  %v553 = vpop.f32.mrb[0].mxu0
  %554 = vmatprep.mubr.f32.mxu0 0.0
  %555 = vmatmul.mubr.f32.gmra.mrb[0].mxu0 %v171
  %v556 = vpop.f32.mrb[0].mxu0
  %v557 = vadd.f32 %v119, %v556
  %v558 = vpop.f32.mrb[0].mxu0
  %559 = vmatprep.mubr.f32.mxu0 0.0
  %560 = vmatmul.mubr.f32.gmra.mrb[0].mxu0 %v174
  %v561 = vpop.f32.mrb[0].mxu0
  %v562 = vadd.f32 %v119, %v561
  %v563 = vpop.f32.mrb[0].mxu0
  %564 = vmatprep.mubr.f32.mxu0 0.0
  %565 = vmatmul.mubr.f32.gmra.mrb[0].mxu0 %v177
  %v566 = vpop.f32.mrb[0].mxu0
  %v567 = vadd.f32 %v119, %v566
  %v568 = vpop.f32.mrb[0].mxu0
  %569 = vmatprep.mubr.f32.mxu0 0.0
  %570 = vmatmul.mubr.f32.gmra.mrb[0].mxu0 %v180
  %v571 = vpop.f32.mrb[0].mxu0
  %v572 = vadd.f32 %v119, %v571
  %v573 = vpop.f32.mrb[0].mxu0
  %574 = vmatprep.mubr.f32.mxu0 0.0
  %575 = vmatmul.mubr.f32.gmra.mrb[0].mxu0 %v183
  %v576 = vpop.f32.mrb[0].mxu0
  %v577 = vadd.f32 %v119, %v576
  %v578 = vpop.f32.mrb[0].mxu0
  %579 = vmatprep.mubr.f32.mxu0 0.0
  %580 = vmatmul.mubr.f32.gmra.mrb[0].mxu0 %v186
  %v581 = vpop.f32.mrb[0].mxu0
  %v582 = vadd.f32 %v119, %v581
  %v583 = vpop.f32.mrb[0].mxu0
  %584 = vmatprep.mubr.f32.mxu0 0.0
  %585 = vmatmul.mubr.f32.gmra.mrb[0].mxu0 %v189
  %v586 = vpop.f32.mrb[0].mxu0
  %v587 = vadd.f32 %v119, %v586
  %v588 = vpop.f32.mrb[0].mxu0
  %589 = vmatprep.mubr.f32.mxu0 0.0
  %590 = vmatmul.mubr.f32.gmra.mrb[0].mxu0 %v192
  %v591 = vpop.f32.mrb[0].mxu0
  %v592 = vadd.f32 %v119, %v591
  %v593 = vpop.f32.mrb[0].mxu0
  %594 = vmatprep.mubr.f32.mxu0 0.0
  %595 = vmatmul.mubr.f32.gmra.mrb[0].mxu0 %v195
  %v596 = vpop.f32.mrb[0].mxu0
  %v597 = vadd.f32 %v119, %v596
  %v598 = vpop.f32.mrb[0].mxu0
  %599 = vmatprep.mubr.f32.mxu0 0.0
  %600 = vmatmul.mubr.f32.gmra.mrb[0].mxu0 %v198
  %v601 = vpop.f32.mrb[0].mxu0
  %v602 = vadd.f32 %v119, %v601
  %v603 = vpop.f32.mrb[0].mxu0
  %604 = vmatprep.mubr.f32.mxu0 0.0
  %605 = vmatmul.mubr.f32.gmra.mrb[0].mxu0 %v201
  %v606 = vpop.f32.mrb[0].mxu0
  %v607 = vadd.f32 %v119, %v606
  %v608 = vpop.f32.mrb[0].mxu0
  %609 = vmatprep.mubr.f32.mxu0 0.0
  %610 = vmatmul.mubr.f32.gmra.mrb[0].mxu0 %v204
  %v611 = vpop.f32.mrb[0].mxu0
  %v612 = vadd.f32 %v119, %v611
  %v613 = vpop.f32.mrb[0].mxu0
  %614 = vmatprep.mubr.f32.mxu0 0.0
  %615 = vmatmul.mubr.f32.gmra.mrb[0].mxu0 %v207
  %v616 = vpop.f32.mrb[0].mxu0
  %v617 = vadd.f32 %v119, %v616
  %v618 = vpop.f32.mrb[0].mxu0
  %619 = vmatprep.mubr.f32.mxu0 0.0
  %620 = vmatmul.mubr.f32.gmra.mrb[0].mxu0 %v210
  %v621 = vpop.f32.mrb[0].mxu0
  %v622 = vadd.f32 %v119, %v621
  %v623 = vpop.f32.mrb[0].mxu0
  %624 = vmatprep.mubr.f32.mxu0 0.0
  %625 = vmatmul.mubr.f32.gmra.mrb[0].mxu0 %v213
  %v626 = vpop.f32.mrb[0].mxu0
  %v627 = vadd.f32 %v119, %v626
  %v628 = vpop.f32.mrb[0].mxu0
  %629 = vmatprep.mubr.f32.mxu0 0.0
  %630 = vmatmul.mubr.f32.gmra.mrb[0].mxu0 %v216
  %v631 = vpop.f32.mrb[0].mxu0
  %v632 = vadd.f32 %v119, %v631
  %v633 = vpop.f32.mrb[0].mxu0
  %634 = vmatprep.mubr.f32.mxu0 0.0
  %635 = vmatmul.mubr.f32.gmra.mrb[0].mxu0 %v219
  %v636 = vpop.f32.mrb[0].mxu0
  %v637 = vadd.f32 %v119, %v636
  %v638 = vpop.f32.mrb[0].mxu0
  %639 = vmatprep.mubr.f32.mxu0 0.0
  %640 = vmatmul.mubr.f32.gmra.mrb[0].mxu0 %v222
  %v641 = vpop.f32.mrb[0].mxu0
  %v642 = vadd.f32 %v119, %v641
  %v643 = vpop.f32.mrb[0].mxu0
  %644 = vmatprep.mubr.f32.mxu0 0.0
  %645 = vmatmul.mubr.f32.gmra.mrb[0].mxu0 %v225
  %v646 = vpop.f32.mrb[0].mxu0
  %v647 = vadd.f32 %v119, %v646
  %v648 = vpop.f32.mrb[0].mxu0
  %649 = vmatprep.mubr.f32.mxu0 0.0
  %650 = vmatmul.mubr.f32.gmra.mrb[0].mxu0 %v228
  %v651 = vpop.f32.mrb[0].mxu0
  %v652 = vadd.f32 %v119, %v651
  %v653 = vpop.f32.mrb[0].mxu0
  %654 = vmatprep.mubr.f32.mxu0 0.0
  %655 = vmatmul.mubr.f32.gmra.mrb[0].mxu0 %v231
  %v656 = vpop.f32.mrb[0].mxu0
  %v657 = vadd.f32 %v119, %v656
  %v658 = vpop.f32.mrb[0].mxu0
  %659 = vmatprep.mubr.f32.mxu0 0.0
  %660 = vmatmul.mubr.f32.gmra.mrb[0].mxu0 %v234
  %v661 = vpop.f32.mrb[0].mxu0
  %v662 = vadd.f32 %v119, %v661
  %v663 = vpop.f32.mrb[0].mxu0
  %664 = vmatprep.mubr.f32.mxu0 0.0
  %665 = vmatmul.mubr.f32.gmra.mrb[0].mxu0 %v237
  %v666 = vpop.f32.mrb[0].mxu0
  %v667 = vadd.f32 %v119, %v666
  %v668 = vpop.f32.mrb[0].mxu0
  %669 = vmatprep.mubr.f32.mxu0 0.0
  %670 = vmatmul.mubr.f32.gmra.mrb[0].mxu0 %v240
  %v671 = vpop.f32.mrb[0].mxu0
  %v672 = vadd.f32 %v119, %v671
  %v673 = vpop.f32.mrb[0].mxu0
  %674 = vmatprep.mubr.f32.mxu0 0.0
  %675 = vmatmul.mubr.f32.gmra.mrb[0].mxu0 %v243
  %v676 = vpop.f32.mrb[0].mxu0
  %v677 = vadd.f32 %v119, %v676
  %v678 = vpop.f32.mrb[0].mxu0
  %679 = vmatprep.mubr.f32.mxu0 0.0
  %680 = vmatmul.mubr.f32.gmra.mrb[0].mxu0 %v246
  %v681 = vpop.f32.mrb[0].mxu0
  %v682 = vadd.f32 %v119, %v681
  %v683 = vpop.f32.mrb[0].mxu0
  %684 = vmatprep.mubr.f32.mxu0 0.0
  %685 = vmatmul.mubr.f32.gmra.mrb[0].mxu0 %v249
  %v686 = vpop.f32.mrb[0].mxu0
  %v687 = vadd.f32 %v119, %v686
  %v688 = vpop.f32.mrb[0].mxu0
  %689 = vmatprep.mubr.f32.mxu0 0.0
  %690 = vmatmul.mubr.f32.gmra.mrb[0].mxu0 %v252
  %v691 = vpop.f32.mrb[0].mxu0
  %v692 = vadd.f32 %v119, %v691
  %v693 = vpop.f32.mrb[0].mxu0
  %694 = vmatprep.mubr.f32.mxu0 0.0
  %695 = vmatmul.mubr.f32.gmra.mrb[0].mxu0 %v255
  %v696 = vpop.f32.mrb[0].mxu0
  %v697 = vadd.f32 %v119, %v696
  %v698 = vpop.f32.mrb[0].mxu0
  %699 = vmatprep.mubr.f32.mxu0 0.0
  %700 = vmatmul.mubr.f32.gmra.mrb[0].mxu0 %v258
  %v701 = vpop.f32.mrb[0].mxu0
  %v702 = vadd.f32 %v119, %v701
  %v703 = vpop.f32.mrb[0].mxu0
  %704 = vmatprep.mubr.f32.mxu0 0.0
  %705 = vmatmul.mubr.f32.gmra.mrb[0].mxu0 %v261
  %v706 = vpop.f32.mrb[0].mxu0
  %v707 = vadd.f32 %v119, %v706
  %v708 = vpop.f32.mrb[0].mxu0
  %709 = vmatprep.mubr.f32.mxu0 0.0
  %710 = vmatmul.mubr.f32.gmra.mrb[0].mxu0 %v264
  %v711 = vpop.f32.mrb[0].mxu0
  %v712 = vadd.f32 %v119, %v711
  %v713 = vpop.f32.mrb[0].mxu0
  %714 = vmatprep.mubr.f32.mxu0 0.0
  %715 = vmatmul.mubr.f32.gmra.mrb[0].mxu0 %v267
  %v716 = vpop.f32.mrb[0].mxu0
  %v717 = vadd.f32 %v119, %v716
  %v718 = vpop.f32.mrb[0].mxu0
  %719 = vmatprep.mubr.f32.mxu0 0.0
  %720 = vmatmul.mubr.f32.gmra.mrb[0].mxu0 %v270
  %v721 = vpop.f32.mrb[0].mxu0
  %v722 = vadd.f32 %v119, %v721
  %v723 = vpop.f32.mrb[0].mxu0
  %724 = vmatprep.mubr.f32.mxu0 0.0
  %725 = vmatmul.mubr.f32.gmra.mrb[0].mxu0 %v273
  %v726 = vpop.f32.mrb[0].mxu0
  %v727 = vadd.f32 %v119, %v726
  %v728 = vpop.f32.mrb[0].mxu0
  %729 = vmatprep.mubr.f32.mxu0 0.0
  %730 = vmatmul.mubr.f32.gmra.mrb[0].mxu0 %v276
  %v731 = vpop.f32.mrb[0].mxu0
  %v732 = vadd.f32 %v119, %v731
  %v733 = vpop.f32.mrb[0].mxu0
  %734 = vmatprep.mubr.f32.mxu0 0.0
  %735 = vmatmul.mubr.f32.gmra.mrb[0].mxu0 %v279
  %v736 = vpop.f32.mrb[0].mxu0
  %v737 = vadd.f32 %v119, %v736
  %v738 = vpop.f32.mrb[0].mxu0
  %739 = vmatprep.mubr.f32.mxu0 0.0
  %740 = vmatmul.mubr.f32.gmra.mrb[0].mxu0 %v282
  %v741 = vpop.f32.mrb[0].mxu0
  %v742 = vadd.f32 %v119, %v741
  %v743 = vpop.f32.mrb[0].mxu0
  %744 = vmatprep.mubr.f32.mxu0 0.0
  %745 = vmatmul.mubr.f32.gmra.mrb[0].mxu0 %v285
  %v746 = vpop.f32.mrb[0].mxu0
  %v747 = vadd.f32 %v119, %v746
  %v748 = vpop.f32.mrb[0].mxu0
  %749 = vmatprep.mubr.f32.mxu0 0.0
  %750 = vmatmul.mubr.f32.gmra.mrb[0].mxu0 %v288
  %v751 = vpop.f32.mrb[0].mxu0
  %v752 = vadd.f32 %v119, %v751
  %v753 = vpop.f32.mrb[0].mxu0
  %754 = vmatprep.mubr.f32.mxu0 0.0
  %755 = vmatmul.mubr.f32.gmra.mrb[0].mxu0 %v291
  %v756 = vpop.f32.mrb[0].mxu0
  %v757 = vadd.f32 %v119, %v756
  %v758 = vpop.f32.mrb[0].mxu0
  %759 = vmatprep.mubr.f32.mxu0 0.0
  %760 = vmatmul.mubr.f32.gmra.mrb[0].mxu0 %v294
  %v761 = vpop.f32.mrb[0].mxu0
  %v762 = vadd.f32 %v119, %v761
  %v763 = vpop.f32.mrb[0].mxu0
  %764 = vmatprep.mubr.f32.mxu0 0.0
  %765 = vmatmul.mubr.f32.gmra.mrb[0].mxu0 %v297
  %v766 = vpop.f32.mrb[0].mxu0
  %v767 = vadd.f32 %v119, %v766
  %v768 = vpop.f32.mrb[0].mxu0
  %769 = vmatprep.mubr.f32.mxu0 0.0
  %770 = vmatmul.mubr.f32.gmra.mrb[0].mxu0 %v300
  %v771 = vpop.f32.mrb[0].mxu0
  %v772 = vadd.f32 %v119, %v771
  %v773 = vpop.f32.mrb[0].mxu0
  %774 = vmatprep.mubr.f32.mxu0 0.0
  %775 = vmatmul.mubr.f32.gmra.mrb[0].mxu0 %v303
  %v776 = vpop.f32.mrb[0].mxu0
  %v777 = vadd.f32 %v119, %v776
  %v778 = vpop.f32.mrb[0].mxu0
  %779 = vmatprep.mubr.f32.mxu0 0.0
  %780 = vmatmul.mubr.f32.gmra.mrb[0].mxu0 %v306
  %v781 = vpop.f32.mrb[0].mxu0
  %v782 = vadd.f32 %v119, %v781
  %v783 = vpop.f32.mrb[0].mxu0
  %784 = vmatprep.mubr.f32.mxu0 0.0
  %785 = vmatmul.mubr.f32.gmra.mrb[0].mxu0 %v309
  %v786 = vpop.f32.mrb[0].mxu0
  %v787 = vadd.f32 %v119, %v786
  %v788 = vpop.f32.mrb[0].mxu0
  %789 = vmatprep.mubr.f32.mxu0 0.0
  %790 = vmatmul.mubr.f32.gmra.mrb[0].mxu0 %v312
  %v791 = vpop.f32.mrb[0].mxu0
  %v792 = vadd.f32 %v119, %v791
  %v793 = vpop.f32.mrb[0].mxu0
  %794 = vmatprep.mubr.f32.mxu0 0.0
  %795 = vmatmul.mubr.f32.gmra.mrb[0].mxu0 %v315
  %v796 = vpop.f32.mrb[0].mxu0
  %v797 = vadd.f32 %v119, %v796
  %v798 = vpop.f32.mrb[0].mxu0
  %799 = vmatprep.mubr.f32.mxu0 0.0
  %800 = vmatmul.mubr.f32.gmra.mrb[0].mxu0 %v318
  %v801 = vpop.f32.mrb[0].mxu0
  %v802 = vadd.f32 %v119, %v801
  %v803 = vpop.f32.mrb[0].mxu0
  %804 = vmatprep.mubr.f32.mxu0 0.0
  %805 = vmatmul.mubr.f32.gmra.mrb[0].mxu0 %v321
  %v806 = vpop.f32.mrb[0].mxu0
  %v807 = vadd.f32 %v119, %v806
  %v808 = vpop.f32.mrb[0].mxu0
  %809 = vmatprep.mubr.f32.mxu0 0.0
  %810 = vmatmul.mubr.f32.gmra.mrb[0].mxu0 %v324
  %v811 = vpop.f32.mrb[0].mxu0
  %v812 = vadd.f32 %v119, %v811
  %v813 = vpop.f32.mrb[0].mxu0
  %814 = vmatprep.mubr.f32.mxu0 0.0
  %815 = vmatmul.mubr.f32.gmra.mrb[0].mxu0 %v327
  %v816 = vpop.f32.mrb[0].mxu0
  %v817 = vadd.f32 %v119, %v816
  %v818 = vpop.f32.mrb[0].mxu0
  %819 = vmatprep.mubr.f32.mxu0 0.0
  %820 = vmatmul.mubr.f32.gmra.mrb[0].mxu0 %v330
  %v821 = vpop.f32.mrb[0].mxu0
  %v822 = vadd.f32 %v119, %v821
  %v823 = vpop.f32.mrb[0].mxu0
  %824 = vmatprep.mubr.f32.mxu0 0.0
  %825 = vmatmul.mubr.f32.gmra.mrb[0].mxu0 %v333
  %v826 = vpop.f32.mrb[0].mxu0
  %v827 = vadd.f32 %v119, %v826
  %v828 = vpop.f32.mrb[0].mxu0
  %829 = vmatprep.mubr.f32.mxu0 0.0
  %830 = vmatmul.mubr.f32.gmra.mrb[0].mxu0 %v336
  %v831 = vpop.f32.mrb[0].mxu0
  %v832 = vadd.f32 %v119, %v831
  %v833 = vpop.f32.mrb[0].mxu0
  %834 = vmatprep.mubr.f32.mxu0 0.0
  %835 = vmatmul.mubr.f32.gmra.mrb[0].mxu0 %v339
  %v836 = vpop.f32.mrb[0].mxu0
  %v837 = vadd.f32 %v119, %v836
  %v838 = vpop.f32.mrb[0].mxu0
  %839 = vmatprep.mubr.f32.mxu0 0.0
  %840 = vmatmul.mubr.f32.gmra.mrb[0].mxu0 %v342
  %v841 = vpop.f32.mrb[0].mxu0
  %v842 = vadd.f32 %v119, %v841
  %v843 = vpop.f32.mrb[0].mxu0
  %844 = vmatprep.mubr.f32.mxu0 0.0
  %845 = vmatmul.mubr.f32.gmra.mrb[0].mxu0 %v345
  %v846 = vpop.f32.mrb[0].mxu0
  %v847 = vadd.f32 %v119, %v846
  %v848 = vpop.f32.mrb[0].mxu0
  %849 = vmatprep.mubr.f32.mxu0 0.0
  %850 = vmatmul.mubr.f32.gmra.mrb[0].mxu0 %v348
  %v851 = vpop.f32.mrb[0].mxu0
  %v852 = vadd.f32 %v119, %v851
  %v853 = vpop.f32.mrb[0].mxu0
  %854 = vmatprep.mubr.f32.mxu0 0.0
  %855 = vmatmul.mubr.f32.gmra.mrb[0].mxu0 %v351
  %v856 = vpop.f32.mrb[0].mxu0
  %v857 = vadd.f32 %v119, %v856
  %v858 = vpop.f32.mrb[0].mxu0
  %859 = vmatprep.mubr.f32.mxu0 0.0
  %860 = vmatmul.mubr.f32.gmra.mrb[0].mxu0 %v354
  %v861 = vpop.f32.mrb[0].mxu0
  %v862 = vadd.f32 %v119, %v861
  %v863 = vpop.f32.mrb[0].mxu0
  %864 = vmatprep.mubr.f32.mxu0 0.0
  %865 = vmatmul.mubr.f32.gmra.mrb[0].mxu0 %v357
  %v866 = vpop.f32.mrb[0].mxu0
  %v867 = vadd.f32 %v119, %v866
  %v868 = vpop.f32.mrb[0].mxu0
  %869 = vmatprep.mubr.f32.mxu0 0.0
  %870 = vmatmul.mubr.f32.gmra.mrb[0].mxu0 %v360
  %v871 = vpop.f32.mrb[0].mxu0
  %v872 = vadd.f32 %v119, %v871
  %v873 = vpop.f32.mrb[0].mxu0
  %874 = vmatprep.mubr.f32.mxu0 0.0
  %875 = vmatmul.mubr.f32.gmra.mrb[0].mxu0 %v363
  %v876 = vpop.f32.mrb[0].mxu0
  %v877 = vadd.f32 %v119, %v876
  %v878 = vpop.f32.mrb[0].mxu0
  %879 = vmatprep.mubr.f32.mxu0 0.0
  %880 = vmatmul.mubr.f32.gmra.mrb[0].mxu0 %v366
  %v881 = vpop.f32.mrb[0].mxu0
  %v882 = vadd.f32 %v119, %v881
  %v883 = vpop.f32.mrb[0].mxu0
  %884 = vmatprep.mubr.f32.mxu0 0.0
  %885 = vmatmul.mubr.f32.gmra.mrb[0].mxu0 %v369
  %v886 = vpop.f32.mrb[0].mxu0
  %v887 = vadd.f32 %v119, %v886
  %v888 = vpop.f32.mrb[0].mxu0
  %889 = vmatprep.mubr.f32.mxu0 0.0
  %890 = vmatmul.mubr.f32.gmra.mrb[0].mxu0 %v372
  %v891 = vpop.f32.mrb[0].mxu0
  %v892 = vadd.f32 %v119, %v891
  %v893 = vpop.f32.mrb[0].mxu0
  %894 = vmatprep.mubr.f32.mxu0 0.0
  %895 = vmatmul.mubr.f32.gmra.mrb[0].mxu0 %v375
  %v896 = vpop.f32.mrb[0].mxu0
  %v897 = vadd.f32 %v119, %v896
  %v898 = vpop.f32.mrb[0].mxu0
  %899 = vmatprep.mubr.f32.mxu0 0.0
  %900 = vmatmul.mubr.f32.gmra.mrb[0].mxu0 %v378
  %v901 = vpop.f32.mrb[0].mxu0
  %v902 = vadd.f32 %v119, %v901
  %v903 = vpop.f32.mrb[0].mxu0
  %904 = vmatprep.mubr.f32.mxu0 0.0
  %905 = vmatmul.mubr.f32.gmra.mrb[0].mxu0 %v381
  %v906 = vpop.f32.mrb[0].mxu0
  %v907 = vadd.f32 %v119, %v906
  %v908 = vpop.f32.mrb[0].mxu0
  %909 = vmatprep.mubr.f32.mxu0 0.0
  %910 = vmatmul.mubr.f32.gmra.mrb[0].mxu0 %v384
  %v911 = vpop.f32.mrb[0].mxu0
  %v912 = vadd.f32 %v119, %v911
  %v913 = vpop.f32.mrb[0].mxu0
  %914 = vmatprep.mubr.f32.mxu0 0.0
  %915 = vmatmul.mubr.f32.gmra.mrb[0].mxu0 %v387
  %v916 = vpop.f32.mrb[0].mxu0
  %v917 = vadd.f32 %v119, %v916
  %v918 = vpop.f32.mrb[0].mxu0
  %919 = vmatprep.mubr.f32.mxu0 0.0
  %920 = vmatmul.mubr.f32.gmra.mrb[0].mxu0 %v390
  %v921 = vpop.f32.mrb[0].mxu0
  %v922 = vadd.f32 %v119, %v921
  %v923 = vpop.f32.mrb[0].mxu0
  %924 = vmatprep.mubr.f32.mxu0 0.0
  %925 = vmatmul.mubr.f32.gmra.mrb[0].mxu0 %v393
  %v926 = vpop.f32.mrb[0].mxu0
  %v927 = vadd.f32 %v119, %v926
  %v928 = vpop.f32.mrb[0].mxu0
  %929 = vmatprep.mubr.f32.mxu0 0.0
  %930 = vmatmul.mubr.f32.gmra.mrb[0].mxu0 %v396
  %v931 = vpop.f32.mrb[0].mxu0
  %v932 = vadd.f32 %v119, %v931
  %v933 = vpop.f32.mrb[0].mxu0
  %934 = vmatprep.mubr.f32.mxu0 0.0
  %935 = vmatmul.mubr.f32.gmra.mrb[0].mxu0 %v399
  %v936 = vpop.f32.mrb[0].mxu0
  %v937 = vadd.f32 %v119, %v936
  %v938 = vpop.f32.mrb[0].mxu0
  %939 = vmatprep.mubr.f32.mxu0 0.0
  %940 = vmatmul.mubr.f32.gmra.mrb[0].mxu0 %v402
  %v941 = vpop.f32.mrb[0].mxu0
  %v942 = vadd.f32 %v119, %v941
  %v943 = vpop.f32.mrb[0].mxu0
  %944 = vmatprep.mubr.f32.mxu0 0.0
  %945 = vmatmul.mubr.f32.gmra.mrb[0].mxu0 %v405
  %v946 = vpop.f32.mrb[0].mxu0
  %v947 = vadd.f32 %v119, %v946
  %v948 = vpop.f32.mrb[0].mxu0
  %949 = vmatprep.mubr.f32.mxu0 0.0
  %950 = vmatmul.mubr.f32.gmra.mrb[0].mxu0 %v408
  %v951 = vpop.f32.mrb[0].mxu0
  %v952 = vadd.f32 %v119, %v951
  %v953 = vpop.f32.mrb[0].mxu0
  %954 = vdwg.mxu0
  %955 = vst.msk [vmem:[%s3] sm:$0xff] %vm121, %v477
  %956 = vst.msk [vmem:[%s3 + $0x8] sm:$0xff] %vm121, %v482
  %957 = vst.msk [vmem:[%s3 + $0x10] sm:$0xff] %vm121, %v487
  %958 = vst.msk [vmem:[%s3 + $0x18] sm:$0xff] %vm121, %v492
  %959 = vst.msk [vmem:[%s3 + $0x20] sm:$0xff] %vm121, %v497
  %960 = vst.msk [vmem:[%s3 + $0x28] sm:$0xff] %vm121, %v502
  %961 = vst.msk [vmem:[%s3 + $0x30] sm:$0xff] %vm121, %v507
  %962 = vst.msk [vmem:[%s3 + $0x38] sm:$0xff] %vm121, %v512
  %963 = vst.msk [vmem:[%s3 + $0x40] sm:$0xff] %vm121, %v517
  %964 = vst.msk [vmem:[%s3 + $0x48] sm:$0xff] %vm121, %v522
  %965 = vst.msk [vmem:[%s3 + $0x50] sm:$0xff] %vm121, %v527
  %966 = vst.msk [vmem:[%s3 + $0x58] sm:$0xff] %vm121, %v532
  %967 = vst.msk [vmem:[%s3 + $0x60] sm:$0xff] %vm121, %v537
  %968 = vst.msk [vmem:[%s3 + $0x68] sm:$0xff] %vm121, %v542
  %969 = vst.msk [vmem:[%s3 + $0x70] sm:$0xff] %vm121, %v547
  %970 = vst.msk [vmem:[%s3 + $0x78] sm:$0xff] %vm121, %v552
  %971 = vst.msk [vmem:[%s3 + $0x80] sm:$0xff] %vm121, %v557
  %972 = vst.msk [vmem:[%s3 + $0x88] sm:$0xff] %vm121, %v562
  %973 = vst.msk [vmem:[%s3 + $0x90] sm:$0xff] %vm121, %v567
  %974 = vst.msk [vmem:[%s3 + $0x98] sm:$0xff] %vm121, %v572
  %975 = vst.msk [vmem:[%s3 + $0xa0] sm:$0xff] %vm121, %v577
  %976 = vst.msk [vmem:[%s3 + $0xa8] sm:$0xff] %vm121, %v582
  %977 = vst.msk [vmem:[%s3 + $0xb0] sm:$0xff] %vm121, %v587
  %978 = vst.msk [vmem:[%s3 + $0xb8] sm:$0xff] %vm121, %v592
  %979 = vst.msk [vmem:[%s3 + $0xc0] sm:$0xff] %vm121, %v597
  %980 = vst.msk [vmem:[%s3 + $0xc8] sm:$0xff] %vm121, %v602
  %981 = vst.msk [vmem:[%s3 + $0xd0] sm:$0xff] %vm121, %v607
  %982 = vst.msk [vmem:[%s3 + $0xd8] sm:$0xff] %vm121, %v612
  %983 = vst.msk [vmem:[%s3 + $0xe0] sm:$0xff] %vm121, %v617
  %984 = vst.msk [vmem:[%s3 + $0xe8] sm:$0xff] %vm121, %v622
  %985 = vst.msk [vmem:[%s3 + $0xf0] sm:$0xff] %vm121, %v627
  %986 = vst.msk [vmem:[%s3 + $0xf8] sm:$0xff] %vm121, %v632
  %987 = vst.msk [vmem:[%s3 + $0x100] sm:$0xff] %vm121, %v637
  %988 = vst.msk [vmem:[%s3 + $0x108] sm:$0xff] %vm121, %v642
  %989 = vst.msk [vmem:[%s3 + $0x110] sm:$0xff] %vm121, %v647
  %990 = vst.msk [vmem:[%s3 + $0x118] sm:$0xff] %vm121, %v652
  %991 = vst.msk [vmem:[%s3 + $0x120] sm:$0xff] %vm121, %v657
  %992 = vst.msk [vmem:[%s3 + $0x128] sm:$0xff] %vm121, %v662
  %993 = vst.msk [vmem:[%s3 + $0x130] sm:$0xff] %vm121, %v667
  %994 = vst.msk [vmem:[%s3 + $0x138] sm:$0xff] %vm121, %v672
  %995 = vst.msk [vmem:[%s3 + $0x140] sm:$0xff] %vm121, %v677
  %996 = vst.msk [vmem:[%s3 + $0x148] sm:$0xff] %vm121, %v682
  %997 = vst.msk [vmem:[%s3 + $0x150] sm:$0xff] %vm121, %v687
  %998 = vst.msk [vmem:[%s3 + $0x158] sm:$0xff] %vm121, %v692
  %999 = vst.msk [vmem:[%s3 + $0x160] sm:$0xff] %vm121, %v697
  %1000 = vst.msk [vmem:[%s3 + $0x168] sm:$0xff] %vm121, %v702
  %1001 = vst.msk [vmem:[%s3 + $0x170] sm:$0xff] %vm121, %v707
  %1002 = vst.msk [vmem:[%s3 + $0x178] sm:$0xff] %vm121, %v712
  %1003 = vst.msk [vmem:[%s3 + $0x180] sm:$0xff] %vm121, %v717
  %1004 = vst.msk [vmem:[%s3 + $0x188] sm:$0xff] %vm121, %v722
  %1005 = vst.msk [vmem:[%s3 + $0x190] sm:$0xff] %vm121, %v727
  %1006 = vst.msk [vmem:[%s3 + $0x198] sm:$0xff] %vm121, %v732
  %1007 = vst.msk [vmem:[%s3 + $0x1a0] sm:$0xff] %vm121, %v737
  %1008 = vst.msk [vmem:[%s3 + $0x1a8] sm:$0xff] %vm121, %v742
  %1009 = vst.msk [vmem:[%s3 + $0x1b0] sm:$0xff] %vm121, %v747
  %1010 = vst.msk [vmem:[%s3 + $0x1b8] sm:$0xff] %vm121, %v752
  %1011 = vst.msk [vmem:[%s3 + $0x1c0] sm:$0xff] %vm121, %v757
  %1012 = vst.msk [vmem:[%s3 + $0x1c8] sm:$0xff] %vm121, %v762
  %1013 = vst.msk [vmem:[%s3 + $0x1d0] sm:$0xff] %vm121, %v767
  %1014 = vst.msk [vmem:[%s3 + $0x1d8] sm:$0xff] %vm121, %v772
  %1015 = vst.msk [vmem:[%s3 + $0x1e0] sm:$0xff] %vm121, %v777
  %1016 = vst.msk [vmem:[%s3 + $0x1e8] sm:$0xff] %vm121, %v782
  %1017 = vst.msk [vmem:[%s3 + $0x1f0] sm:$0xff] %vm121, %v787
  %1018 = vst.msk [vmem:[%s3 + $0x1f8] sm:$0xff] %vm121, %v792
  %1019 = vst.msk [vmem:[%s3 + $0x200] sm:$0xff] %vm121, %v797
  %1020 = vst.msk [vmem:[%s3 + $0x208] sm:$0xff] %vm121, %v802
  %1021 = vst.msk [vmem:[%s3 + $0x210] sm:$0xff] %vm121, %v807
  %1022 = vst.msk [vmem:[%s3 + $0x218] sm:$0xff] %vm121, %v812
  %1023 = vst.msk [vmem:[%s3 + $0x220] sm:$0xff] %vm121, %v817
  %1024 = vst.msk [vmem:[%s3 + $0x228] sm:$0xff] %vm121, %v822
  %1025 = vst.msk [vmem:[%s3 + $0x230] sm:$0xff] %vm121, %v827
  %1026 = vst.msk [vmem:[%s3 + $0x238] sm:$0xff] %vm121, %v832
  %1027 = vst.msk [vmem:[%s3 + $0x240] sm:$0xff] %vm121, %v837
  %1028 = vst.msk [vmem:[%s3 + $0x248] sm:$0xff] %vm121, %v842
  %1029 = vst.msk [vmem:[%s3 + $0x250] sm:$0xff] %vm121, %v847
  %1030 = vst.msk [vmem:[%s3 + $0x258] sm:$0xff] %vm121, %v852
  %1031 = vst.msk [vmem:[%s3 + $0x260] sm:$0xff] %vm121, %v857
  %1032 = vst.msk [vmem:[%s3 + $0x268] sm:$0xff] %vm121, %v862
  %1033 = vst.msk [vmem:[%s3 + $0x270] sm:$0xff] %vm121, %v867
  %1034 = vst.msk [vmem:[%s3 + $0x278] sm:$0xff] %vm121, %v872
  %1035 = vst.msk [vmem:[%s3 + $0x280] sm:$0xff] %vm121, %v877
  %1036 = vst.msk [vmem:[%s3 + $0x288] sm:$0xff] %vm121, %v882
  %1037 = vst.msk [vmem:[%s3 + $0x290] sm:$0xff] %vm121, %v887
  %1038 = vst.msk [vmem:[%s3 + $0x298] sm:$0xff] %vm121, %v892
  %1039 = vst.msk [vmem:[%s3 + $0x2a0] sm:$0xff] %vm121, %v897
  %1040 = vst.msk [vmem:[%s3 + $0x2a8] sm:$0xff] %vm121, %v902
  %1041 = vst.msk [vmem:[%s3 + $0x2b0] sm:$0xff] %vm121, %v907
  %1042 = vst.msk [vmem:[%s3 + $0x2b8] sm:$0xff] %vm121, %v912
  %1043 = vst.msk [vmem:[%s3 + $0x2c0] sm:$0xff] %vm121, %v917
  %1044 = vst.msk [vmem:[%s3 + $0x2c8] sm:$0xff] %vm121, %v922
  %1045 = vst.msk [vmem:[%s3 + $0x2d0] sm:$0xff] %vm121, %v927
  %1046 = vst.msk [vmem:[%s3 + $0x2d8] sm:$0xff] %vm121, %v932
  %1047 = vst.msk [vmem:[%s3 + $0x2e0] sm:$0xff] %vm121, %v937
  %1048 = vst.msk [vmem:[%s3 + $0x2e8] sm:$0xff] %vm121, %v942
  %1049 = vst.msk [vmem:[%s3 + $0x2f0] sm:$0xff] %vm121, %v947
  %1050 = vst.msk [vmem:[%s3 + $0x2f8] sm:$0xff] %vm121, %v952
  // Predicated region
  $region14: #{tpu_custom_call.1} parent=0 // pred_check
    _
  $region15: #{tpu_custom_call.1} parent=0 // pred_check_branch
    %1052 = sbr.rel (0) target = $region17
  $region16: #{tpu_custom_call.1} parent=0 // pred_region
    _
  $region17: #{tpu_custom_call.1} parent=0 // pred_fallthru
    _
  // Predicated region
  $region18: #{tpu_custom_call.1} parent=0 // pred_check
    _
  $region19: #{tpu_custom_call.1} parent=0 // pred_check_branch
    %1054 = sbr.rel (0) target = $region21
  $region20: #{tpu_custom_call.1} parent=0 // pred_region
    _
  $region21: #{tpu_custom_call.1} parent=0 // pred_fallthru
    _

</llo_original>
